<compile_context>
chip_gen: v7x
topology: tpu7x:2x2x1
jax: 0.10.0
libtpu: 0.0.40
codegen_flags: <defaults>
</compile_context>

<pallas_src>
import functools

import jax
import jax.numpy as jnp
from jax.experimental import pallas as pl
from jax.experimental.pallas import tpu as pltpu


def _kd_kernel(ys_ref, yt_ref, out_ref, acc_ref, *,
               inv_T: float, scale: float, batch: int, tile_b: int,
               mask_tail: bool):
    i = pl.program_id(0)

    @pl.when(i == 0)
    def _init():
        acc_ref[...] = jnp.zeros_like(acc_ref)

    # Cast in-kernel (inputs stay in native dtype through the DMA).
    ys = ys_ref[...].astype(jnp.float32) * inv_T
    yt = yt_ref[...].astype(jnp.float32) * inv_T

    if mask_tail:
        # Tail tile reads undefined rows past the end of the array; force
        # them to 0 logits. softmax(0) is uniform for both student and
        # teacher, so those rows contribute exactly 0 KL and no NaN/Inf from
        # undefined data can leak into the accumulator.
        rows_left = batch - i * tile_b
        row_ids = jax.lax.broadcasted_iota(jnp.int32, ys.shape, 0)
        valid = row_ids < rows_left
        ys = jnp.where(valid, ys, 0.0)
        yt = jnp.where(valid, yt, 0.0)

    # Student: log_softmax(y_s / T, axis=1) -- max-shifted for stability.
    ys_max = jnp.max(ys, axis=1, keepdims=True)
    ys_shift = ys - ys_max
    log_z_s = jnp.log(jnp.sum(jnp.exp(ys_shift), axis=1, keepdims=True))
    log_p_s = ys_shift - log_z_s

    # Teacher: softmax(y_t / T, axis=1) and its log (stable).
    yt_max = jnp.max(yt, axis=1, keepdims=True)
    yt_shift = yt - yt_max
    exp_t = jnp.exp(yt_shift)
    z_t = jnp.sum(exp_t, axis=1, keepdims=True)
    log_p_t = yt_shift - jnp.log(z_t)

    # Staged reduction:
    #   per-row (lane) reduce of the un-normalized KL numerator -> (TB, 1),
    #   normalize per row with an exact reciprocal, then one sublane reduce
    #   into the (1, 1) accumulator.
    row_num = jnp.sum(exp_t * (log_p_t - log_p_s), axis=1, keepdims=True)
    row_kl = row_num * pl.reciprocal(z_t)                    # exact (approx=False)
    acc_ref[...] += jnp.sum(row_kl, axis=0, keepdims=True)   # (1, 1)

    @pl.when(i == pl.num_programs(0) - 1)
    def _finalize():
        out_ref[...] = acc_ref[...] * scale


def _pick_batch_tile(B: int, C: int, itemsize: int,
                     vmem_budget_bytes: int = 32 * 1024 * 1024) -> int:
    """Largest batch tile whose double-buffered footprint (2 inputs x 2
    pipeline buffers, lane-padded C) fits the VMEM budget.  Rounded to the
    packed-sublane multiple for the dtype, capped at 2048 rows."""
    sub = 8 * max(1, 4 // max(itemsize, 1))          # 8 (f32), 16 (bf16), 32 (i8)
    c_pad = ((C + 127) // 128) * 128                 # lane padding in VMEM
    bytes_per_row = 4 * c_pad * itemsize             # 2 inputs x 2 buffers
    tb = vmem_budget_bytes // max(bytes_per_row, 1)
    tb = max(sub, min(2048, tb))
    tb = (tb // sub) * sub
    b_pad = ((B + sub - 1) // sub) * sub
    return max(sub, min(tb, b_pad))


def distill_kl(y_s: jax.Array, y_t: jax.Array, T: float,
               tile_b: int | None = None) -> jax.Array:
    """Pallas implementation of DistillKL.forward. y_s, y_t: [B, C] logits."""
    assert y_s.shape == y_t.shape and y_s.ndim == 2
    B, C = y_s.shape
    itemsize = jnp.dtype(y_s.dtype).itemsize

    TB = tile_b if tile_b is not None else _pick_batch_tile(B, C, itemsize)
    num_tiles = pl.cdiv(B, TB)
    mask_tail = (B % TB) != 0

    kernel = functools.partial(
        _kd_kernel,
        inv_T=1.0 / float(T),
        scale=float(T) * float(T) / float(B),   # batchmean over ORIGINAL B
        batch=B,
        tile_b=TB,
        mask_tail=mask_tail,
    )

    cost = pl.CostEstimate(
        flops=int(12 * B * C),
        transcendentals=int(2 * B * C + 2 * B),
        bytes_accessed=int(2 * B * C * itemsize) + 4,
    )

    out = pl.pallas_call(
        kernel,
        out_shape=jax.ShapeDtypeStruct((1, 1), jnp.float32),
        grid_spec=pltpu.PrefetchScalarGridSpec(
            num_scalar_prefetch=0,
            grid=(num_tiles,),
            in_specs=[
                pl.BlockSpec((TB, C), lambda i: (i, 0)),
                pl.BlockSpec((TB, C), lambda i: (i, 0)),
            ],
            out_specs=pl.BlockSpec((1, 1), lambda i: (0, 0)),
            scratch_shapes=[pltpu.VMEM((1, 1), jnp.float32)],
        ),
        compiler_params=pltpu.CompilerParams(
            dimension_semantics=("arbitrary",),   # reduction-carried output
            vmem_limit_bytes=48 * 1024 * 1024,
        ),
        cost_estimate=cost,
    )(y_s, y_t)
    return out[0, 0]


def _reference(y_s, y_t, T):
    # Pure-JAX reference (matches the PyTorch module semantics).
    log_p_s = jax.nn.log_softmax(y_s.astype(jnp.float32) / T, axis=1)
    p_t = jax.nn.softmax(y_t.astype(jnp.float32) / T, axis=1)
    log_p_t = jax.nn.log_softmax(y_t.astype(jnp.float32) / T, axis=1)
    return jnp.sum(p_t * (log_p_t - log_p_s)) / y_s.shape[0] * T * T


if __name__ == "__main__":
    T = 4.0
    key = jax.random.PRNGKey(0)
    k1, k2, k3, k4, k5, k6 = jax.random.split(key, 6)

    # Case 1: small batch of f32 logits over 32 classes (single tile).
    B, C = 8, 32
    y_s = jax.random.normal(k1, (B, C), dtype=jnp.float32) * 2.0
    y_t = jax.random.normal(k2, (B, C), dtype=jnp.float32) * 2.0
    loss = distill_kl(y_s, y_t, T)
    jax.block_until_ready(loss)
    ref = _reference(y_s, y_t, T)
    assert jnp.allclose(loss, ref, rtol=1e-5, atol=1e-6), (loss, ref)

    # Case 2: ragged batch (exercises in-kernel tail masking), bf16 logits.
    B2, C2 = 19, 32
    y_s2 = (jax.random.normal(k3, (B2, C2), dtype=jnp.float32) * 2.0).astype(jnp.bfloat16)
    y_t2 = (jax.random.normal(k4, (B2, C2), dtype=jnp.float32) * 2.0).astype(jnp.bfloat16)
    loss2 = distill_kl(y_s2, y_t2, T)
    jax.block_until_ready(loss2)
    ref2 = _reference(y_s2, y_t2, T)
    assert jnp.allclose(loss2, ref2, rtol=1e-5, atol=1e-6), (loss2, ref2)

    # Case 3: multi-tile streaming accumulation + ragged last tile
    # (small forced tile to exercise the grid-carried accumulator path).
    B3, C3 = 40, 128
    y_s3 = jax.random.normal(k5, (B3, C3), dtype=jnp.float32) * 2.0
    y_t3 = jax.random.normal(k6, (B3, C3), dtype=jnp.float32) * 2.0
    loss3 = distill_kl(y_s3, y_t3, T, tile_b=16)
    jax.block_until_ready(loss3)
    ref3 = _reference(y_s3, y_t3, T)
    assert jnp.allclose(loss3, ref3, rtol=1e-5, atol=1e-6), (loss3, ref3)

    print("KERNEL_OK")
</pallas_src>

<mosaic_0001>
module attributes {stable_mosaic.version = 11 : i64} {
  func.func @_kd_kernel(%arg0: i32, %arg1: memref<8x32xf32, #tpu.memory_space<vmem>>, %arg2: memref<8x32xf32, #tpu.memory_space<vmem>>, %arg3: memref<1x1xf32, #tpu.memory_space<vmem>>, %arg4: memref<1x1xf32, #tpu.memory_space<vmem>>) attributes {dimension_semantics = [#tpu.dimension_semantics<arbitrary>], iteration_bounds = array<i64: 1>, scalar_prefetch = 0 : i64, scratch_operands = 1 : i64, tpu.core_type = #tpu.core_type<tc>, window_params = [{transform_indices = @transform_0, window_bounds = array<i64: 8, 32>}, {transform_indices = @transform_1, window_bounds = array<i64: 8, 32>}, {pipeline_mode = #tpu.pipeline_mode<synchronous>, transform_indices = @transform_2, window_bounds = array<i64: 1, 1>}]} {
    %c0_i32 = arith.constant 0 : i32
    %0 = arith.cmpi eq, %arg0, %c0_i32 : i32
    %1 = arith.extui %0 : i1 to i32
    %c0_i32_0 = arith.constant 0 : i32
    %2 = arith.cmpi ne, %1, %c0_i32_0 : i32
    scf.if %2 {
      %cst_17 = arith.constant 0.000000e+00 : f32
      %43 = vector.broadcast %cst_17 : f32 to vector<1x1xf32>
      %c0_18 = arith.constant 0 : index
      %c0_19 = arith.constant 0 : index
      %44 = vector.load %arg4[%c0_18, %c0_19] : memref<1x1xf32, #tpu.memory_space<vmem>>, vector<1x1xf32>
      tpu.vector_store %arg4[%c0_18, %c0_19], %43 {strides = array<i32>} : memref<1x1xf32, #tpu.memory_space<vmem>>, vector<1x1xf32>,
    } else {
    }
    %c0 = arith.constant 0 : index
    %c0_1 = arith.constant 0 : index
    %3 = vector.load %arg1[%c0, %c0_1] : memref<8x32xf32, #tpu.memory_space<vmem>>, vector<8x32xf32>
    %cst = arith.constant 2.500000e-01 : f32
    %4 = vector.broadcast %cst : f32 to vector<8x32xf32>
    %5 = arith.mulf %3, %4 : vector<8x32xf32>
    %c0_2 = arith.constant 0 : index
    %c0_3 = arith.constant 0 : index
    %6 = vector.load %arg2[%c0_2, %c0_3] : memref<8x32xf32, #tpu.memory_space<vmem>>, vector<8x32xf32>
    %cst_4 = arith.constant 2.500000e-01 : f32
    %7 = vector.broadcast %cst_4 : f32 to vector<8x32xf32>
    %8 = arith.mulf %6, %7 : vector<8x32xf32>
    %cst_5 = arith.constant dense<0xFF800000> : vector<8xf32>
    %9 = vector.multi_reduction <maximumf>, %5, %cst_5 [1] : vector<8x32xf32> to vector<8xf32>
    %10 = vector.shape_cast %9 : vector<8xf32> to vector<8x1xf32>
    %11 = vector.broadcast %10 : vector<8x1xf32> to vector<8x32xf32>
    %12 = arith.subf %5, %11 : vector<8x32xf32>
    %13 = math.exp %12 : vector<8x32xf32>
    %cst_6 = arith.constant dense<0.000000e+00> : vector<8xf32>
    %14 = vector.multi_reduction <add>, %13, %cst_6 [1] : vector<8x32xf32> to vector<8xf32>
    %15 = vector.shape_cast %14 : vector<8xf32> to vector<8x1xf32>
    %16 = math.log %15 : vector<8x1xf32>
    %17 = vector.broadcast %16 : vector<8x1xf32> to vector<8x32xf32>
    %18 = arith.subf %12, %17 : vector<8x32xf32>
    %cst_7 = arith.constant dense<0xFF800000> : vector<8xf32>
    %19 = vector.multi_reduction <maximumf>, %8, %cst_7 [1] : vector<8x32xf32> to vector<8xf32>
    %20 = vector.shape_cast %19 : vector<8xf32> to vector<8x1xf32>
    %21 = vector.broadcast %20 : vector<8x1xf32> to vector<8x32xf32>
    %22 = arith.subf %8, %21 : vector<8x32xf32>
    %23 = math.exp %22 : vector<8x32xf32>
    %cst_8 = arith.constant dense<0.000000e+00> : vector<8xf32>
    %24 = vector.multi_reduction <add>, %23, %cst_8 [1] : vector<8x32xf32> to vector<8xf32>
    %25 = vector.shape_cast %24 : vector<8xf32> to vector<8x1xf32>
    %26 = math.log %25 : vector<8x1xf32>
    %27 = vector.broadcast %26 : vector<8x1xf32> to vector<8x32xf32>
    %28 = arith.subf %22, %27 : vector<8x32xf32>
    %29 = arith.subf %28, %18 : vector<8x32xf32>
    %30 = arith.mulf %23, %29 : vector<8x32xf32>
    %cst_9 = arith.constant dense<0.000000e+00> : vector<8xf32>
    %31 = vector.multi_reduction <add>, %30, %cst_9 [1] : vector<8x32xf32> to vector<8xf32>
    %32 = vector.shape_cast %31 : vector<8xf32> to vector<8x1xf32>
    %33 = tpu.reciprocal %25 : vector<8x1xf32> -> vector<8x1xf32>
    %34 = arith.mulf %32, %33 : vector<8x1xf32>
    %c0_10 = arith.constant 0 : index
    %c0_11 = arith.constant 0 : index
    %35 = vector.load %arg4[%c0_10, %c0_11] : memref<1x1xf32, #tpu.memory_space<vmem>>, vector<1x1xf32>
    %cst_12 = arith.constant dense<0.000000e+00> : vector<1xf32>
    %36 = vector.multi_reduction <add>, %34, %cst_12 [0] : vector<8x1xf32> to vector<1xf32>
    %37 = vector.shape_cast %36 : vector<1xf32> to vector<1x1xf32>
    %38 = arith.addf %35, %37 : vector<1x1xf32>
    %c0_13 = arith.constant 0 : index
    %c0_14 = arith.constant 0 : index
    %39 = vector.load %arg4[%c0_13, %c0_14] : memref<1x1xf32, #tpu.memory_space<vmem>>, vector<1x1xf32>
    tpu.vector_store %arg4[%c0_13, %c0_14], %38 {strides = array<i32>} : memref<1x1xf32, #tpu.memory_space<vmem>>, vector<1x1xf32>,
    %c0_i32_15 = arith.constant 0 : i32
    %40 = arith.cmpi eq, %arg0, %c0_i32_15 : i32
    %41 = arith.extui %40 : i1 to i32
    %c0_i32_16 = arith.constant 0 : i32
    %42 = arith.cmpi ne, %41, %c0_i32_16 : i32
    scf.if %42 {
      %c0_17 = arith.constant 0 : index
      %c0_18 = arith.constant 0 : index
      %43 = vector.load %arg4[%c0_17, %c0_18] : memref<1x1xf32, #tpu.memory_space<vmem>>, vector<1x1xf32>
      %cst_19 = arith.constant 2.000000e+00 : f32
      %44 = vector.broadcast %cst_19 : f32 to vector<1x1xf32>
      %45 = arith.mulf %43, %44 : vector<1x1xf32>
      %c0_20 = arith.constant 0 : index
      %c0_21 = arith.constant 0 : index
      %46 = vector.load %arg3[%c0_20, %c0_21] : memref<1x1xf32, #tpu.memory_space<vmem>>, vector<1x1xf32>
      tpu.vector_store %arg3[%c0_20, %c0_21], %45 {strides = array<i32>} : memref<1x1xf32, #tpu.memory_space<vmem>>, vector<1x1xf32>,
    } else {
    }
    return
  }
  func.func @transform_0(%arg0: i32) -> (i32, i32) {
    %c0_i32 = arith.constant 0 : i32
    %c0_i32_0 = arith.constant 0 : i32
    return %arg0, %c0_i32 : i32, i32
  }
  func.func @transform_1(%arg0: i32) -> (i32, i32) {
    %c0_i32 = arith.constant 0 : i32
    %c0_i32_0 = arith.constant 0 : i32
    return %arg0, %c0_i32 : i32, i32
  }
  func.func @transform_2(%arg0: i32) -> (i32, i32) {
    %c0_i32 = arith.constant 0 : i32
    %c0_i32_0 = arith.constant 0 : i32
    %c0_i32_1 = arith.constant 0 : i32
    return %c0_i32, %c0_i32_0 : i32, i32
  }
}

</mosaic_0001>

<llo_original>
// kernel: tpu_custom_call.1
$region0: #{tpu_custom_call.1}
  #allocation0 [shape = 'u32[]', space=smem, size = 0x4, offset = 0x4, fixed_abs, tag = 'smem constant byte address 0x4 - core index']
  #allocation1 [shape = 'u32[144,128]{1,0:T(1,128)}', space=vmem, size = 0x12000, scoped, tag = 'internal scratch']
  #allocation2 [shape = 'f32[1,1]{1,0:T(1,128)}', space=vmem, size = 0x200, scoped, tag = 'scratch operand']
  %s0 = inlined_call_operand.hbm [shape: f32[8,32], index: 0, kind: input, shape index: {}]
  %s1 = inlined_call_operand.hbm [shape: f32[8,32], index: 1, kind: input, shape index: {}]
  %s2 = inlined_call_operand.hbm [shape: f32[1,1], index: 2, kind: output, shape index: {}]
  %s3 = sld [smem:[#allocation0]]
  $region34: #{tpu_custom_call.1} parent=0
    _
  %s5 = ssub.s32 1, %s3
  %s6 = scalar_select 0, %s5, %s3
  $region1: #{tpu_custom_call.1} parent=0
    #allocation3 [shape = 'u8[4096]{0}', space=vmem, size = 0x1000, scoped, tag = 'input window, operand 0, single buffered']
    #allocation4 [shape = 's32[1]{0}', space=sflag, size = 0x4, scoped, tag = 'scoped memory for tpu_custom_call.1']
    #allocation5 [shape = 's32[1]{0}', space=sflag, size = 0x4, scoped, tag = 'scoped memory for tpu_custom_call.1']
    #allocation6 [shape = 'u8[4096]{0}', space=vmem, size = 0x1000, scoped, tag = 'input window, operand 1, single buffered']
    #allocation7 [shape = 's32[1]{0}', space=sflag, size = 0x4, scoped, tag = 'scoped memory for tpu_custom_call.1']
    #allocation8 [shape = 'u8[512]{0}', space=vmem, size = 0x400, scoped, tag = 'output window, operand 0, single buffered']
    %7 = vsyncpa [#allocation4], 0
    %8 = vsyncpa [#allocation7], 0
    %9 = vsyncpa [#allocation5], 0
    // Predicated region
    $region2: #{tpu_custom_call.1} parent=1 // pred_check
      _
    $region3: #{tpu_custom_call.1} parent=1 // pred_check_branch
      %11 = sbr.rel (0) target = $region5
    $region4: #{tpu_custom_call.1} parent=1 // pred_region
      %s13 = ssub.s32 128, 128
      %14 = vsyncadd [#allocation4], %s13
      %s16 = sshll.u32 [#allocation3], 4
      %s17 = int_to_ptr.vmem [resolvable:$true] %s16
      %19 = dma.hbm_to_vmem [thread:$0]  %s0, 128, %s17, [#allocation4]
    $region5: #{tpu_custom_call.1} parent=1 // pred_fallthru
      _
    // Predicated region
    $region6: #{tpu_custom_call.1} parent=1 // pred_check
      _
    $region7: #{tpu_custom_call.1} parent=1 // pred_check_branch
      %21 = sbr.rel (0) target = $region9
    $region8: #{tpu_custom_call.1} parent=1 // pred_region
      %s23 = ssub.s32 128, 128
      %24 = vsyncadd [#allocation7], %s23
      %s26 = sshll.u32 [#allocation6], 4
      %s27 = int_to_ptr.vmem [resolvable:$true] %s26
      %29 = dma.hbm_to_vmem [thread:$0]  %s1, 128, %s27, [#allocation7]
    $region9: #{tpu_custom_call.1} parent=1 // pred_fallthru
      _
    // Predicated region
    $region10: #{tpu_custom_call.1} parent=1 // pred_check
      _
    $region11: #{tpu_custom_call.1} parent=1 // pred_check_branch
      %31 = sbr.rel (0) target = $region13
    $region12: #{tpu_custom_call.1} parent=1 // pred_region
      %32 = dma.done [#allocation4], 128
    $region13: #{tpu_custom_call.1} parent=1 // pred_fallthru
      _
    // Predicated region
    $region14: #{tpu_custom_call.1} parent=1 // pred_check
      _
    $region15: #{tpu_custom_call.1} parent=1 // pred_check_branch
      %34 = sbr.rel (0) target = $region17
    $region16: #{tpu_custom_call.1} parent=1 // pred_region
      %35 = dma.done [#allocation7], 128
    $region17: #{tpu_custom_call.1} parent=1 // pred_fallthru
      _
    %p36 = scmp.eq.s32.totalorder 0, 0
    // Predicated region
    $region18: #{tpu_custom_call.1} parent=1 // pred_check
      %p37 = pneg %p36
    $region19: #{tpu_custom_call.1} parent=1 // pred_check_branch
      %39 = sbr.rel (%p37) target = $region21
    $region20: #{tpu_custom_call.1} parent=1 // pred_region
      %vm40 = vcmask 0
      %41 = vst.msk [vmem:[#allocation2] sm:$0x1] %vm40, 0.0
    $region21: #{tpu_custom_call.1} parent=1 // pred_fallthru
      _
    %v42 = vld [vmem:[#allocation3] sm:$0xff]
    %v43 = vmul.f32 %v42, 0.25
    %v44 = vld [vmem:[#allocation6] sm:$0xff]
    %v45 = vmul.f32 %v44, 0.25
    %vm46 = vcmask 261120
    %v47 = vsel %vm46, %v43, -inf
    %48 = vmax.xlane.f32.xlu0 %v47
    %v49 = vpop.xlane.xlu0 %48
    %v50 = vsub.f32 %v43, %v49
    %v51 = vmul.f32 %v50, 1.442695
    %v52 = vpow.pop %v51
    %v53 = vsel %vm46, %v52, 0.0
    %54 = vadd.xlane.f32.xlu0 %v53
    %v55 = vpop.xlane.xlu0 %54
    %v56 = vlog2.pop %v55
    %v57 = vmul.f32 %v56, 0.6931472
    %v58 = vsub.f32 %v50, %v57
    %v59 = vsel %vm46, %v45, -inf
    %60 = vmax.xlane.f32.xlu0 %v59
    %v61 = vpop.xlane.xlu0 %60
    %v62 = vsub.f32 %v45, %v61
    %v63 = vmul.f32 %v62, 1.442695
    %v64 = vpow.pop %v63
    %v65 = vsel %vm46, %v64, 0.0
    %66 = vadd.xlane.f32.xlu0 %v65
    %v67 = vpop.xlane.xlu0 %66
    %v68 = vlog2.pop %v67
    %v69 = vmul.f32 %v68, 0.6931472
    %v70 = vsub.f32 %v62, %v69
    %v71 = vsub.f32 %v70, %v58
    %v72 = vmul.f32 %v64, %v71
    %v73 = vsel %vm46, %v72, 0.0
    %74 = vadd.xlane.f32.xlu0 %v73
    %v75 = vpop.xlane.xlu0 %74
    %v76 = vrcp.pop %v67
    %v77 = vmul.f32 %v75, %v76
    %v78 = vld [vmem:[#allocation2] sm:$0x1]
    %v79 = vrot.slane %v77, 4
    %v80 = vadd.f32 %v77, %v79
    %v81 = vrot.slane %v80, 2
    %v82 = vadd.f32 %v80, %v81
    %v83 = vrot.slane %v82, 1
    %v84 = vadd.f32 %v82, %v83
    %v85 = vadd.f32 %v78, %v84
    %vm86 = vcmask 0
    %87 = vst.msk [vmem:[#allocation2] sm:$0x1] %vm86, %v85
    // Predicated region
    $region22: #{tpu_custom_call.1} parent=1 // pred_check
      %p88 = pneg %p36
    $region23: #{tpu_custom_call.1} parent=1 // pred_check_branch
      %90 = sbr.rel (%p88) target = $region25
    $region24: #{tpu_custom_call.1} parent=1 // pred_region
      %v91 = vld [vmem:[#allocation2] sm:$0x1]
      %v92 = vmul.f32 %v91, 2.0
      %93 = vst.msk [vmem:[#allocation8] sm:$0x1] %vm86, %v92
    $region25: #{tpu_custom_call.1} parent=1 // pred_fallthru
      _
    // Predicated region
    $region26: #{tpu_custom_call.1} parent=1 // pred_check
      _
    $region27: #{tpu_custom_call.1} parent=1 // pred_check_branch
      %95 = sbr.rel (0) target = $region29
    $region28: #{tpu_custom_call.1} parent=1 // pred_region
      %s97 = ssub.s32 16, 16
      %98 = vsyncadd [#allocation5], %s97
      %s100 = sshll.u32 [#allocation8], 4
      %s101 = int_to_ptr.vmem [resolvable:$true] %s100
      %103 = dma.vmem_to_hbm [thread:$0]  %s101, 16, %s2, [#allocation5]
    $region29: #{tpu_custom_call.1} parent=1 // pred_fallthru
      _
    // Predicated region
    $region30: #{tpu_custom_call.1} parent=1 // pred_check
      _
    $region31: #{tpu_custom_call.1} parent=1 // pred_check_branch
      %105 = sbr.rel (0) target = $region33
    $region32: #{tpu_custom_call.1} parent=1 // pred_region
      %106 = dma.done [#allocation5], 16
    $region33: #{tpu_custom_call.1} parent=1 // pred_fallthru
      _
    %107 = vsyncpa [#allocation4], 1
    %108 = vsyncpa [#allocation7], 1
    %109 = vsyncpa [#allocation5], 1

</llo_original>
